<compile_context>
chip_gen: v5e
topology: v5e:2x2
jax: 0.10.0
libtpu: 0.0.40
codegen_flags: <defaults>
</compile_context>

<pallas_src>
import jax
import jax.numpy as jnp
from jax import lax
from jax.experimental import pallas as pl
from jax.experimental.pallas import tpu as pltpu


# ----------------------------------------------------------------------------
# Hardware-aware sizing helpers
# ----------------------------------------------------------------------------

def _tpu_vmem_capacity_bytes():
    """Physical VMEM per TensorCore (128 MiB on v5e/v6e, 64 MiB on v7x)."""
    default = 64 << 20  # conservative (v7x-sized) fallback if the query fails
    try:
        info = pltpu.get_tpu_info()
        cap = int(getattr(info, "vmem_capacity_bytes", 0) or 0)
        return cap if cap > 0 else default
    except Exception:
        return default


def _divisors(n):
    return [d for d in range(1, n + 1) if n % d == 0]


def _sim_tile_candidates(T):
    """Valid test-seq tiles: full T, or any divisor that is a multiple of 128
    (keeps the lane-dense (G, tT) output store unmasked)."""
    cands = {T}
    for d in range(128, T, 128):
        if T % d == 0:
            cands.add(d)
    return sorted(cands, reverse=True)


def _choose_sim_tiles(S, T, D, G, itemsize, budget, min_nt=1):
    """Pick (support shots per step, test-seq tile) for the similarity kernel."""

    def cost(sS, tT):
        nS = S // sS
        dbl_inputs = 2 * sS * tT * D * itemsize + 2 * G * D * 4
        scratch = tT * D * 4 if nS > 1 else 0
        dbl_out = 2 * G * tT * 4
        return dbl_inputs + scratch + dbl_out

    feasible = [t for t in _sim_tile_candidates(T) if cost(1, t) <= budget]
    if not feasible:
        raise ValueError(
            f"prototype_similarity: no test-seq tile of T={T} (full T or a "
            f"multiple of 128) fits the {budget >> 20} MiB VMEM budget; pad or "
            f"shrink test_seq_len / emb dim D={D}.")
    # 2-TC chips (v7x): keep both TensorCores busy when B alone cannot.
    if min_nt > 1:
        split = [t for t in feasible if T // t >= min_nt]
        if split:
            feasible = split
    tT = feasible[0]

    sS = 1
    for cand in sorted(_divisors(S), reverse=True):
        if cost(cand, tT) <= budget:
            sS = cand
            break
    return sS, tT, cost(sS, tT)


def _choose_proto_chunk(SL, D, G, itemsize, budget):
    """Pick the fused support-row chunk (contraction depth) for the prototype
    kernel: largest divisor of S*L that fits, preferring MXU-aligned (x256)
    depths when chunking is forced (v6e/v7x MXUs are 256 deep)."""

    def cost(cL):
        nC = SL // cL
        dbl_inputs = 2 * cL * (D + G) * itemsize
        scratch = (G * D + G) * 4 if nC > 1 else 0
        dbl_out = 2 * G * D * 4
        return dbl_inputs + scratch + dbl_out

    cands = sorted({SL} | {d for d in _divisors(SL) if d % 8 == 0},
                   reverse=True)
    feasible = [c for c in cands if cost(c) <= budget]
    if not feasible:
        raise ValueError(
            f"prototype_similarity: no support chunk of S*L={SL} rows fits "
            f"the {budget >> 20} MiB VMEM budget (D={D}, num_tags={G}).")
    cL = feasible[0]
    if cL != SL:
        aligned = [c for c in feasible if c % 256 == 0 and c >= 256]
        if aligned:
            cL = aligned[0]
    return cL, cost(cL)


def _vmem_limit(vmem_cost, cap):
    return int(min(max(vmem_cost * 5 // 4 + (2 << 20), 16 << 20), cap * 7 // 8))


# ----------------------------------------------------------------------------
# Pass 1: per-batch prototypes  (B, S*L, D) x (B, S*L, G) -> (B, G, D) f32
# ----------------------------------------------------------------------------

def _prototype_call(support_flat, targets_flat, G, budget, cap):
    B, SL, D = support_flat.shape
    itemsize = support_flat.dtype.itemsize
    cL, vmem_cost = _choose_proto_chunk(SL, D, G, itemsize, budget)
    nC = SL // cL

    if nC == 1:
        # Single reduction step: no scratch round-trip needed.
        def kernel(sup_ref, tgt_ref, proto_ref):
            sup = sup_ref[0]                              # (SL, D) native dtype
            tgt = tgt_ref[0]                              # (SL, G) native dtype
            acc = lax.dot_general(tgt, sup, (((0,), (0,)), ((), ())),
                                  preferred_element_type=jnp.float32)  # (G, D)
            ones = jnp.ones((cL, 1), dtype=tgt.dtype)
            cnt = lax.dot_general(tgt, ones, (((0,), (0,)), ((), ())),
                                  preferred_element_type=jnp.float32)  # (G, 1)
            inv = pl.reciprocal(cnt + 0.0001, approx=True)             # EUP
            proto_ref[0] = acc * inv
        scratch = []
    else:
        def kernel(sup_ref, tgt_ref, proto_ref, acc_ref, cnt_ref):
            c = pl.program_id(1)

            @pl.when(c == 0)
            def _():
                acc_ref[...] = jnp.zeros_like(acc_ref)
                cnt_ref[...] = jnp.zeros_like(cnt_ref)

            sup = sup_ref[0]                              # (cL, D)
            tgt = tgt_ref[0]                              # (cL, G)
            acc_ref[...] += lax.dot_general(
                tgt, sup, (((0,), (0,)), ((), ())),
                preferred_element_type=jnp.float32)
            ones = jnp.ones((cL, 1), dtype=tgt.dtype)
            cnt_ref[...] += lax.dot_general(
                tgt, ones, (((0,), (0,)), ((), ())),
                preferred_element_type=jnp.float32)

            @pl.when(c == nC - 1)
            def _():
                inv = pl.reciprocal(cnt_ref[...] + 0.0001, approx=True)
                proto_ref[0] = acc_ref[...] * inv
        scratch = [pltpu.VMEM((G, D), jnp.float32),
                   pltpu.VMEM((G, 1), jnp.float32)]

    grid_spec = pltpu.PrefetchScalarGridSpec(
        num_scalar_prefetch=0,
        grid=(B, nC),
        in_specs=[
            pl.BlockSpec((1, cL, D), lambda b, c: (b, c, 0)),
            pl.BlockSpec((1, cL, G), lambda b, c: (b, c, 0)),
        ],
        out_specs=pl.BlockSpec((1, G, D), lambda b, c: (b, 0, 0)),
        scratch_shapes=scratch,
    )

    flops = 2 * B * SL * D * G + 2 * B * SL * G
    bytes_accessed = B * SL * (D + G) * itemsize + B * G * D * 4

    return pl.pallas_call(
        kernel,
        out_shape=jax.ShapeDtypeStruct((B, G, D), jnp.float32),
        grid_spec=grid_spec,
        compiler_params=pltpu.CompilerParams(
            dimension_semantics=("parallel", "arbitrary"),
            vmem_limit_bytes=_vmem_limit(vmem_cost, cap)),
        cost_estimate=pl.CostEstimate(
            flops=flops, transcendentals=B * G, bytes_accessed=bytes_accessed),
    )(support_flat, targets_flat)


# ----------------------------------------------------------------------------
# Pass 2: similarity  (B, S, T, D) x (B, G, D) -> (B, G, T) f32 (lane-dense T)
# ----------------------------------------------------------------------------

def _similarity_call(test_reps, prototypes, budget, cap, min_nt):
    B, S, T, D = test_reps.shape
    G = prototypes.shape[1]
    itemsize = test_reps.dtype.itemsize
    sS, tT, vmem_cost = _choose_sim_tiles(S, T, D, G, itemsize, budget, min_nt)
    nS = S // sS
    nT = T // tT
    inv_S = 1.0 / S

    if nS == 1:
        # Single reduction step: skip the f32 scratch round-trip entirely.
        def kernel(test_ref, proto_ref, sim_ref):
            tsum = jnp.sum(test_ref[0].astype(jnp.float32), axis=0)  # (tT, D)
            scores = lax.dot_general(                                # (G, tT)
                proto_ref[0].astype(jnp.bfloat16),
                tsum.astype(jnp.bfloat16),
                dimension_numbers=(((1,), (1,)), ((), ())),
                preferred_element_type=jnp.float32)
            sim_ref[0] = scores * inv_S
        scratch = []
    else:
        def kernel(test_ref, proto_ref, sim_ref, tsum_ref):
            s = pl.program_id(2)

            @pl.when(s == 0)
            def _():
                tsum_ref[...] = jnp.zeros_like(tsum_ref)

            # Running shot-sum of test reps in f32 (mean applied at finalize).
            tsum_ref[...] += jnp.sum(test_ref[0].astype(jnp.float32), axis=0)

            @pl.when(s == nS - 1)
            def _():
                # Single bf16 MXU pass; MXU N-dim / store lane axis is tT.
                scores = lax.dot_general(
                    proto_ref[0].astype(jnp.bfloat16),
                    tsum_ref[...].astype(jnp.bfloat16),
                    dimension_numbers=(((1,), (1,)), ((), ())),
                    preferred_element_type=jnp.float32)
                sim_ref[0] = scores * inv_S
        scratch = [pltpu.VMEM((tT, D), jnp.float32)]

    grid_spec = pltpu.PrefetchScalarGridSpec(
        num_scalar_prefetch=0,
        grid=(B, nT, nS),   # S-chunks innermost ("arbitrary" reduction axis)
        in_specs=[
            pl.BlockSpec((1, sS, tT, D), lambda b, tt, s: (b, s, tt, 0)),
            pl.BlockSpec((1, G, D), lambda b, tt, s: (b, 0, 0)),
        ],
        out_specs=pl.BlockSpec((1, G, tT), lambda b, tt, s: (b, 0, tt)),
        scratch_shapes=scratch,
    )

    flops = B * S * T * D + 2 * B * G * D * T
    bytes_accessed = (B * S * T * D * itemsize + nT * B * G * D * 4
                      + B * G * T * 4)

    return pl.pallas_call(
        kernel,
        out_shape=jax.ShapeDtypeStruct((B, G, T), jnp.float32),
        grid_spec=grid_spec,
        compiler_params=pltpu.CompilerParams(
            dimension_semantics=("parallel", "parallel", "arbitrary"),
            vmem_limit_bytes=_vmem_limit(vmem_cost, cap)),
        cost_estimate=pl.CostEstimate(
            flops=flops, transcendentals=0, bytes_accessed=bytes_accessed),
    )(test_reps, prototypes)


# ----------------------------------------------------------------------------
# Module-level wrapper (PrototypeSimilarityScorer.forward, dot sim_func)
# ----------------------------------------------------------------------------

def prototype_similarity(test_reps, support_reps, support_targets):
    """test_reps (B,S,T,D), support_reps (B,S,L,D), support_targets (B,S,L,G)
    one-hot  ->  (B, T, G) float32 similarity."""
    B, S, T, D = test_reps.shape
    L = support_reps.shape[2]
    G = support_targets.shape[-1]

    cap = _tpu_vmem_capacity_bytes()
    budget = cap * 3 // 4          # ~96 MiB on v5e/v6e, ~48 MiB on v7x
    # 64 MiB VMEM per core => v7x-class chip with 2 TensorCores: make sure the
    # parallel grid axes can feed both cores even when B == 1.
    min_nt = 2 if (cap <= (64 << 20) and B < 2) else 1

    # One-hot targets are exact in bf16; matching reps dtype keeps the MXU
    # operands homogeneous.  Flatten the support axes in the wrapper (free HBM
    # metadata reshape) so the kernels never relayout in VMEM.
    support_targets = support_targets.astype(support_reps.dtype)
    support_flat = support_reps.reshape(B, S * L, D)
    targets_flat = support_targets.reshape(B, S * L, G)

    prototypes = _prototype_call(support_flat, targets_flat, G, budget, cap)
    sim_gt = _similarity_call(test_reps, prototypes, budget, cap, min_nt)

    # Kernel output is lane-dense (B, G, T); the module contract is (B, T, G).
    # (If the consumer can take (B, G, T) directly, drop this transpose.)
    return jnp.swapaxes(sim_gt, 1, 2)


def update_mlc_support_tags_mask(support_targets, support_output_mask):
    """Side-effect of forward() (module attribute, not returned). Plain-JAX glue."""
    B = support_targets.shape[0]
    G = support_targets.shape[-1]
    m = (support_output_mask[..., None].astype(jnp.float32)
         * support_targets.astype(jnp.float32))
    m = jnp.sum(m.reshape(B, -1, G), axis=1)
    return (m >= 1).astype(jnp.float32)


def reference_forward(test_reps, support_reps, support_targets):
    """Plain-JAX port of the PyTorch forward, for verification."""
    B, S, T, D = test_reps.shape
    L = support_reps.shape[2]
    G = support_targets.shape[-1]
    test_mean = jnp.mean(test_reps.astype(jnp.float32), axis=1)          # (B,T,D)
    sup = support_reps.astype(jnp.float32).reshape(B * S, L, D)
    tgt = support_targets.astype(jnp.float32).reshape(B * S, L, G)
    sum_reps = jnp.einsum('blg,bld->bgd', tgt, sup)
    sum_reps = jnp.sum(sum_reps.reshape(B, S, G, D), axis=1)             # (B,G,D)
    tag_count = jnp.sum(tgt.reshape(B, -1, G), axis=1)[..., None] + 0.0001
    proto = sum_reps / tag_count
    return jnp.einsum('btd,bgd->btg', test_mean, proto)                   # (B,T,G)


if __name__ == "__main__":
    key = jax.random.PRNGKey(0)
    B, S, T, L, D, G = 2, 2, 8, 8, 32, 4

    k1, k2, k3 = jax.random.split(key, 3)
    # Model representations in bf16 (native training dtype); no f32 upcast.
    test_reps = jax.random.normal(k1, (B, S, T, D), dtype=jnp.float32).astype(jnp.bfloat16)
    support_reps = jax.random.normal(k2, (B, S, L, D), dtype=jnp.float32).astype(jnp.bfloat16)
    labels = jax.random.randint(k3, (B, S, L), 0, G)
    support_targets = jax.nn.one_hot(labels, G, dtype=jnp.bfloat16)       # (B,S,L,G)
    test_output_mask = jnp.ones((B, T), dtype=jnp.float32)                # unused by forward
    support_output_mask = jnp.ones((B, S, L), dtype=jnp.float32)

    # Side-effect state of the module (plain JAX glue, not the returned value).
    _tags_mask = update_mlc_support_tags_mask(support_targets, support_output_mask)

    sim = prototype_similarity(test_reps, support_reps, support_targets)
    sim = jax.block_until_ready(sim)

    ref = reference_forward(test_reps, support_reps, support_targets)
    assert sim.shape == (B, T, G), sim.shape
    max_err = float(jnp.max(jnp.abs(sim - ref)))
    # bf16 streaming + bf16 finalize MXU matmul + EUP approx reciprocal:
    # expected deviation ~1e-2 for D=32-scale dot products vs the f32 reference.
    assert jnp.allclose(sim, ref, rtol=1e-2, atol=3e-2), max_err

    print("KERNEL_OK")
</pallas_src>

<mosaic_0001>
module attributes {stable_mosaic.version = 11 : i64} {
  func.func @kernel(%arg0: i32, %arg1: i32, %arg2: memref<1x16x32xbf16, #tpu.memory_space<vmem>>, %arg3: memref<1x16x4xbf16, #tpu.memory_space<vmem>>, %arg4: memref<1x4x32xf32, #tpu.memory_space<vmem>>) attributes {dimension_semantics = [#tpu.dimension_semantics<parallel>, #tpu.dimension_semantics<arbitrary>], iteration_bounds = array<i64: 2, 1>, scalar_prefetch = 0 : i64, scratch_operands = 0 : i64, tpu.core_type = #tpu.core_type<tc>, window_params = [{transform_indices = @transform_0, window_bounds = array<i64: 1, 16, 32>}, {transform_indices = @transform_1, window_bounds = array<i64: 1, 16, 4>}, {transform_indices = @transform_2, window_bounds = array<i64: 1, 4, 32>}]} {
    %c0 = arith.constant 0 : index
    %c0_0 = arith.constant 0 : index
    %c0_1 = arith.constant 0 : index
    %0 = vector.load %arg2[%c0, %c0_0, %c0_1] : memref<1x16x32xbf16, #tpu.memory_space<vmem>>, vector<1x16x32xbf16>
    %1 = vector.shape_cast %0 : vector<1x16x32xbf16> to vector<16x32xbf16>
    %c0_2 = arith.constant 0 : index
    %c0_3 = arith.constant 0 : index
    %c0_4 = arith.constant 0 : index
    %2 = vector.load %arg3[%c0_2, %c0_3, %c0_4] : memref<1x16x4xbf16, #tpu.memory_space<vmem>>, vector<1x16x4xbf16>
    %3 = vector.shape_cast %2 : vector<1x16x4xbf16> to vector<16x4xbf16>
    %cst = arith.constant dense<0.000000e+00> : vector<4x32xf32>
    %4 = tpu.matmul %3, %1, %cst {dimension_numbers = #tpu.dot_dimension_numbers<[0], [0], [1], [1], [0, 1, 1, 1], [], []>} : vector<16x4xbf16>, vector<16x32xbf16>, vector<4x32xf32> -> vector<4x32xf32>
    %cst_5 = arith.constant 1.000000e+00 : bf16
    %5 = vector.broadcast %cst_5 : bf16 to vector<16x1xbf16>
    %cst_6 = arith.constant dense<0.000000e+00> : vector<4x1xf32>
    %6 = tpu.matmul %3, %5, %cst_6 {dimension_numbers = #tpu.dot_dimension_numbers<[0], [0], [1], [1], [0, 1, 1, 1], [], []>} : vector<16x4xbf16>, vector<16x1xbf16>, vector<4x1xf32> -> vector<4x1xf32>
    %cst_7 = arith.constant 9.99999974E-5 : f32
    %7 = vector.broadcast %cst_7 : f32 to vector<4x1xf32>
    %8 = arith.addf %6, %7 : vector<4x1xf32>
    %9 = tpu.reciprocal %8 {approx = true} : vector<4x1xf32> -> vector<4x1xf32>
    %10 = vector.broadcast %9 : vector<4x1xf32> to vector<4x32xf32>
    %11 = arith.mulf %4, %10 : vector<4x32xf32>
    %c0_8 = arith.constant 0 : index
    %c0_9 = arith.constant 0 : index
    %c0_10 = arith.constant 0 : index
    %12 = vector.load %arg4[%c0_8, %c0_9, %c0_10] : memref<1x4x32xf32, #tpu.memory_space<vmem>>, vector<1x4x32xf32>
    %13 = vector.shape_cast %12 : vector<1x4x32xf32> to vector<4x32xf32>
    %14 = vector.shape_cast %11 : vector<4x32xf32> to vector<1x4x32xf32>
    tpu.vector_store %arg4[%c0_8, %c0_9, %c0_10], %14 {strides = array<i32>} : memref<1x4x32xf32, #tpu.memory_space<vmem>>, vector<1x4x32xf32>,
    return
  }
  func.func @transform_0(%arg0: i32, %arg1: i32) -> (i32, i32, i32) {
    %c0_i32 = arith.constant 0 : i32
    %c0_i32_0 = arith.constant 0 : i32
    return %arg0, %arg1, %c0_i32 : i32, i32, i32
  }
  func.func @transform_1(%arg0: i32, %arg1: i32) -> (i32, i32, i32) {
    %c0_i32 = arith.constant 0 : i32
    %c0_i32_0 = arith.constant 0 : i32
    return %arg0, %arg1, %c0_i32 : i32, i32, i32
  }
  func.func @transform_2(%arg0: i32, %arg1: i32) -> (i32, i32, i32) {
    %c0_i32 = arith.constant 0 : i32
    %c0_i32_0 = arith.constant 0 : i32
    %c0_i32_1 = arith.constant 0 : i32
    return %arg0, %c0_i32, %c0_i32_0 : i32, i32, i32
  }
}

</mosaic_0001>

<llo_original>
// kernel: tpu_custom_call.1
$region0: #{tpu_custom_call.1}
  #allocation0 [shape = 'u32[]', space=smem, size = 0x4, offset = 0x4, fixed_abs, tag = 'smem constant byte address 0x4 - core index']
  #allocation1 [shape = 'u32[72,128]{1,0:T(1,128)}', space=vmem, size = 0x9000, scoped, tag = 'internal scratch']
  %s0 = inlined_call_operand.vmem [shape: bf16[2,16,32], index: 0, kind: input, shape index: {}]
  %s1 = inlined_call_operand.vmem [shape: bf16[2,16,4], index: 1, kind: input, shape index: {}]
  %s2 = inlined_call_operand.hbm [shape: f32[2,4,32], index: 2, kind: output, shape index: {}]
  %s3 = sld [smem:[#allocation0]]
  $region41: #{tpu_custom_call.1} parent=0
    _
  %s5 = ssub.s32 1, %s3
  %s6 = scalar_select 0, %s5, %s3
  $region1: #{tpu_custom_call.1} parent=0
    #allocation2 [shape = 'u8[4096]{0}', space=vmem, size = 0x1000, scoped, tag = 'output window, operand 0']
    #allocation3 [shape = 's32[2]{0}', space=sflag, size = 0x8, scoped, tag = 'scoped memory for tpu_custom_call.1']
    %7 = vsyncpa [#allocation3], 0
    %s8 = scalar_lea.sflag [#allocation3], 1
    %9 = vsyncpa %s8, 0
    loop: start=0, step=1, limit=4
    $region2: #{tpu_custom_call.1} parent=1 // loop_pre_header
      _
    $region3: #{tpu_custom_call.1} parent=1 // loop_header
      %s11 = sphi 0, %s15
      %p12 = scmp.ge.s32.totalorder %s11, 4
      %s18 = sphi 0, %s30
      %s19 = sphi 0, %s26
      %s20 = sphi 0, %s18
      %s21 = sphi 0, %s19
      %s22 = sphi 0, %s20
      %s23 = sphi 0, %s21
      %s35 = sphi 0, %s37
      %s38 = sphi 0, %s35
      %s39 = sphi 0, %s38
      %s55 = sphi 0, %s39
      %s63 = sphi 0, %s65
      %s66 = sphi 0, %s63
      %s67 = sphi 0, %s66
      %s83 = sphi 0, %s67
      %s89 = sphi 0, %s91
      %s92 = sphi 0, %s89
      %s93 = sphi 0, %s92
      %s109 = sphi 0, %s93
    $region4: #{tpu_custom_call.1} parent=1 // loop_header_branch
      %14 = sbr.rel (%p12) target = $region8
    $region5: #{tpu_custom_call.1} parent=1 // loop_body
      %s16 = ssub.s32 %s11, 1
      %s17 = ssub.s32 %s11, 2
      %s24 = sadd.s32 1, %s19
      %p25 = scmp.ge.s32.totalorder %s24, 1
      %s26 = scalar_select %p25, 0, %s24
      %s27 = sadd.s32 1, %s18
      %s28 = scalar_select %p25, %s27, %s18
      %p29 = scmp.ge.s32.totalorder %s28, 2
      %s30 = scalar_select %p29, 0, %s28
      %s31 = ssub.s32 %s18, %s30
      %s32 = ssub.s32 %s19, %s26
      %s33 = sor.u32 %s31, %s32
      %p34 = scmp.eq.s32.totalorder %s33, 0
      %s36 = sadd.s32 %s35, 1
      %s37 = scalar_select %p34, %s35, %s36
      %p40 = pneg %p34
      %p41 = scmp.eq.s32.totalorder %s11, 1
      %p42 = por %p40, %p41
      %p43 = scmp.ne.s32.totalorder %s35, %s38
      %p44 = scmp.eq.s32.totalorder %s11, 0
      %p45 = por %p43, %p44
      %p46 = scmp.ne.s32.totalorder %s35, %s38
      %p47 = scmp.eq.s32.totalorder %s16, 1
      %p48 = por %p46, %p47
      %p49 = scmp.ne.s32.totalorder %s38, %s39
      %p50 = scmp.eq.s32.totalorder %s16, 0
      %p51 = por %p49, %p50
      %p52 = scmp.ne.s32.totalorder %s38, %s39
      %p53 = scmp.eq.s32.totalorder %s17, 1
      %p54 = por %p52, %p53
      %p56 = scmp.ne.s32.totalorder %s39, %s55
      %p57 = scmp.eq.s32.totalorder %s17, 0
      %p58 = por %p56, %p57
      %s59 = ssub.s32 %s18, %s30
      %s60 = ssub.s32 %s19, %s26
      %s61 = sor.u32 %s59, %s60
      %p62 = scmp.eq.s32.totalorder %s61, 0
      %s64 = sadd.s32 %s63, 1
      %s65 = scalar_select %p62, %s63, %s64
      %p68 = pneg %p62
      %p69 = scmp.eq.s32.totalorder %s11, 1
      %p70 = por %p68, %p69
      %p71 = scmp.ne.s32.totalorder %s63, %s66
      %p72 = scmp.eq.s32.totalorder %s11, 0
      %p73 = por %p71, %p72
      %p74 = scmp.ne.s32.totalorder %s63, %s66
      %p75 = scmp.eq.s32.totalorder %s16, 1
      %p76 = por %p74, %p75
      %p77 = scmp.ne.s32.totalorder %s66, %s67
      %p78 = scmp.eq.s32.totalorder %s16, 0
      %p79 = por %p77, %p78
      %p80 = scmp.ne.s32.totalorder %s66, %s67
      %p81 = scmp.eq.s32.totalorder %s17, 1
      %p82 = por %p80, %p81
      %p84 = scmp.ne.s32.totalorder %s67, %s83
      %p85 = scmp.eq.s32.totalorder %s17, 0
      %p86 = por %p84, %p85
      %s87 = ssub.s32 %s18, %s30
      %p88 = scmp.eq.s32.totalorder %s87, 0
      %s90 = sadd.s32 %s89, 1
      %s91 = scalar_select %p88, %s89, %s90
      %p94 = pneg %p88
      %p95 = scmp.eq.s32.totalorder %s11, 1
      %p96 = por %p94, %p95
      %p97 = scmp.ne.s32.totalorder %s89, %s92
      %p98 = scmp.eq.s32.totalorder %s11, 0
      %p99 = por %p97, %p98
      %p100 = scmp.ne.s32.totalorder %s89, %s92
      %p101 = scmp.eq.s32.totalorder %s16, 1
      %p102 = por %p100, %p101
      %p103 = scmp.ne.s32.totalorder %s92, %s93
      %p104 = scmp.eq.s32.totalorder %s16, 0
      %p105 = por %p103, %p104
      %p106 = scmp.ne.s32.totalorder %s92, %s93
      %p107 = scmp.eq.s32.totalorder %s17, 1
      %p108 = por %p106, %p107
      %p110 = scmp.ne.s32.totalorder %s93, %s109
      %p111 = scmp.eq.s32.totalorder %s17, 0
      %p112 = por %p110, %p111
      %p113 = scmp.le.s32.totalorder 1, %s11
      %p114 = scmp.lt.s32.totalorder %s11, 3
      %p115 = pnand %p113, %p114
      %p116 = pneg %p115
      // Predicated region
      $region9: #{tpu_custom_call.1} parent=5 // pred_check
        _
      $region10: #{tpu_custom_call.1} parent=5 // pred_check_branch
        %118 = sbr.rel (%p115) target = $region12
      $region11: #{tpu_custom_call.1} parent=5 // pred_region
        %s119 = ssub.s32 %s11, 1
      $region12: #{tpu_custom_call.1} parent=5 // pred_fallthru
        _
      %p120 = scmp.lt.s32.totalorder %s11, 2
      // Predicated region
      $region13: #{tpu_custom_call.1} parent=5 // pred_check
        %p121 = pneg %p120
      $region14: #{tpu_custom_call.1} parent=5 // pred_check_branch
        %123 = sbr.rel (%p121) target = $region16
      $region15: #{tpu_custom_call.1} parent=5 // pred_region
        // Predicated region
        $region17: #{tpu_custom_call.1} parent=15 // pred_check
          %p124 = pneg %p45
        $region18: #{tpu_custom_call.1} parent=15 // pred_check_branch
          %126 = sbr.rel (%p124) target = $region20
        $region19: #{tpu_custom_call.1} parent=15 // pred_region
          %s127 = smul.u32 2, %s19
          %p128 = scmp.lt.s32.totalorder %s18, 1
          %s129 = scalar_select %p128, %s18, 1
          %p130 = scmp.lt.s32.totalorder %s127, 1
          %s131 = scalar_select %p130, %s127, 1
          %s132 = smul.addr %s129, 2
          %s133 = sadd.s32 %s131, %s132
          %s134 = smul.addr %s133, 4
          %s135 = scalar_lea.vmem %s0, %s134
          %s136 = smul.u32 2, %s19
        $region20: #{tpu_custom_call.1} parent=15 // pred_fallthru
          _
        // Predicated region
        $region21: #{tpu_custom_call.1} parent=15 // pred_check
          %p137 = pneg %p73
        $region22: #{tpu_custom_call.1} parent=15 // pred_check_branch
          %139 = sbr.rel (%p137) target = $region24
        $region23: #{tpu_custom_call.1} parent=15 // pred_region
          %s140 = smul.u32 2, %s19
          %p141 = scmp.lt.s32.totalorder %s18, 1
          %s142 = scalar_select %p141, %s18, 1
          %p143 = scmp.lt.s32.totalorder %s140, 1
          %s144 = scalar_select %p143, %s140, 1
          %s145 = smul.addr %s142, 2
          %s146 = sadd.s32 %s144, %s145
          %s147 = smul.addr %s146, 4
          %s148 = scalar_lea.vmem %s1, %s147
          %s149 = smul.u32 2, %s19
        $region24: #{tpu_custom_call.1} parent=15 // pred_fallthru
          _
      $region16: #{tpu_custom_call.1} parent=5 // pred_fallthru
        _
      %p150 = scmp.le.s32.totalorder 1, %s11
      %p151 = scmp.lt.s32.totalorder %s11, 3
      %p152 = pnand %p150, %p151
      %p153 = pneg %p152
      // Predicated region
      $region25: #{tpu_custom_call.1} parent=5 // pred_check
        _
      $region26: #{tpu_custom_call.1} parent=5 // pred_check_branch
        %155 = sbr.rel (%p152) target = $region28
      $region27: #{tpu_custom_call.1} parent=5 // pred_region
        %s156 = ssub.s32 %s11, 1
        %s157 = smul.u32 2, %s21
        %p158 = scmp.lt.s32.totalorder %s20, 1
        %s159 = scalar_select %p158, %s20, 1
        %p160 = scmp.lt.s32.totalorder %s157, 1
        %s161 = scalar_select %p160, %s157, 1
        %s162 = smul.addr %s159, 2
        %s163 = sadd.s32 %s161, %s162
        %s164 = smul.addr %s163, 4
        %s165 = scalar_lea.vmem %s0, %s164
        %p166 = pneg %p51
        %p167 = pneg %p48
        %s168 = smul.u32 2, %s21
        %p169 = scmp.lt.s32.totalorder %s20, 1
        %s170 = scalar_select %p169, %s20, 1
        %p171 = scmp.lt.s32.totalorder %s168, 1
        %s172 = scalar_select %p171, %s168, 1
        %s173 = smul.addr %s170, 2
        %s174 = sadd.s32 %s172, %s173
        %s175 = smul.addr %s174, 4
        %s176 = scalar_lea.vmem %s1, %s175
        %p177 = pneg %p79
        %p178 = pneg %p76
        %p179 = pneg %p105
        %p180 = pneg %p102
        %s181 = sand.u32 %s92, 1
        %s182 = scalar_lea.sflag [#allocation3], %s181
        %s183 = sand.u32 %s92, 1
        %s184 = smul.addr %s183, 4
        %s185 = scalar_lea.vmem [#allocation2], %s184
        %s186 = smul.u32 2, %s21
        %p187 = scmp.lt.s32.totalorder %s20, 1
        %s188 = scalar_select %p187, %s20, 1
        %p189 = scmp.lt.s32.totalorder %s186, 1
        %s190 = scalar_select %p189, %s186, 1
        %s191 = smul.addr %s188, 2
        %s192 = sadd.s32 %s190, %s191
        %s193 = smul.addr %s192, 4
        %s194 = scalar_lea.vmem %s0, %s193
        %s195 = smul.u32 2, %s21
        %s196 = smul.u32 2, %s21
        %p197 = scmp.lt.s32.totalorder %s20, 1
        %s198 = scalar_select %p197, %s20, 1
        %p199 = scmp.lt.s32.totalorder %s196, 1
        %s200 = scalar_select %p199, %s196, 1
        %s201 = smul.addr %s198, 2
        %s202 = sadd.s32 %s200, %s201
        %s203 = smul.addr %s202, 4
        %s204 = scalar_lea.vmem %s1, %s203
        %s205 = smul.u32 2, %s21
        %v208 = vld [vmem:[%s194] sm:$0xf]
        %v209 = vld [vmem:[%s194 + $0x4] sm:$0xf]
        %v210 = vld [vmem:[%s204] sm:$0xf]
        %v211 = vld [vmem:[%s204 + $0x4] sm:$0xf]
        %v214 = vunpack.c.l.b16 %v210
        %v215 = vunpack.c.l.b16 %v211
        %v216 = vpack.c.b16 %v215, %v214
        %218 = vxpose.xlu0.c.b16.start [1/8] %v216, 128
        %219 = vxpose.xlu0.c.b16.cont [2/8] 0, 128
        %220 = vxpose.xlu0.c.b16.cont [3/8] 0, 128
        %221 = vxpose.xlu0.c.b16.cont [4/8] 0, 128
        %222 = vxpose.xlu0.c.b16.cont [5/8] 0, 128
        %223 = vxpose.xlu0.c.b16.cont [6/8] 0, 128
        %224 = vxpose.xlu0.c.b16.cont [7/8] 0, 128
        %225 = vxpose.xlu0.c.b16.end [8/8] 0, 128
        %v226 = vpop.trf.xlu0
        %v227 = vpop.trf.xlu0
        %v228 = vpop.trf.xlu0
        %v229 = vpop.trf.xlu0
        %v230 = vpop.trf.xlu0
        %v231 = vpop.trf.xlu0
        %v232 = vpop.trf.xlu0
        %v233 = vpop.trf.xlu0
        %v236 = vunpack.c.l.b16 %v208
        %v237 = vunpack.c.l.b16 %v209
        %v238 = vpack.c.b16 %v237, %v236
        %vm240 = vcmask 130048
        %v242 = vsel %vm240, %v226, 0
        %244 = vmatpush.bf16.msra.mxu0 0
        %245 = vmatpush.bf16.msra.mxu0 0
        %246 = vmatpush.bf16.msra.mxu0 0
        %247 = vmatpush.bf16.msra.mxu0 0
        %248 = vmatpush.bf16.msra.mxu0 0
        %249 = vmatpush.bf16.msra.mxu0 0
        %250 = vmatpush.bf16.msra.mxu0 0
        %251 = vmatpush.bf16.msra.mxu0 %v238
        %252 = vmatmul.bf16.gmra.mxu0 %v242
        %v253 = vpop.f32.mrf.mxu0
        %v254 = vadd.f32 0.0, %v253
        %v255 = vpop.f32.mrf.mxu0
        %256 = vdwg.mxu0
        %257 = vmatpush.bf16.msra.mxu0 0
        %258 = vmatpush.bf16.msra.mxu0 0
        %259 = vmatpush.bf16.msra.mxu0 0
        %260 = vmatpush.bf16.msra.mxu0 0
        %261 = vmatpush.bf16.msra.mxu0 0
        %262 = vmatpush.bf16.msra.mxu0 0
        %263 = vmatpush.bf16.msra.mxu0 0
        %264 = vmatpush.bf16.msra.mxu0 1065369472
        %265 = vmatmul.bf16.gmra.mxu0 %v242
        %v266 = vpop.f32.mrf.mxu0
        %v267 = vadd.f32 0.0001, %v266
        %v268 = vpop.f32.mrf.mxu0
        %269 = vdwg.mxu0
        %v270 = vrcp.pop %v267
        %272 = vset.pattern.permute.xlu0 0
        %273 = vperm.xlu0 %272, %v270
        %v274 = vpop.permute.xlu0 %273
        %v276 = vmul.f32 %v254, %v274
        %vm277 = vcmask 257024
        %278 = vst.msk [vmem:[%s185] sm:$0xf] %vm277, %v276
        %s279 = sand.u32 %s92, 1
        %s280 = scalar_lea.sflag [#allocation3], %s279
        %s281 = sand.u32 %s92, 1
        %s282 = smul.addr %s281, 4
        %s283 = scalar_lea.vmem [#allocation2], %s282
        // Predicated region
        $region29: #{tpu_custom_call.1} parent=27 // pred_check
          %p284 = pneg %p102
        $region30: #{tpu_custom_call.1} parent=27 // pred_check_branch
          %286 = sbr.rel (%p284) target = $region32
        $region31: #{tpu_custom_call.1} parent=27 // pred_region
          %288 = vsyncadd %s280, 0
          %s289 = smul.addr %s20, 4
          %s290 = scalar_lea.hbm %s2, %s289
          %s292 = sshll.u32 %s283, 4
          %s293 = int_to_ptr.vmem [resolvable:$true] %s292
          %s294 = sshll.u32 %s290, 4
          %s295 = int_to_ptr.hbm [resolvable:$true] %s294
          %297 = dma.vmem_to_hbm [thread:$0]  %s293, 64, %s295, %s280
        $region32: #{tpu_custom_call.1} parent=27 // pred_fallthru
          _
      $region28: #{tpu_custom_call.1} parent=5 // pred_fallthru
        _
      %p298 = scmp.le.s32.totalorder 2, %s11
      // Predicated region
      $region33: #{tpu_custom_call.1} parent=5 // pred_check
        %p299 = pneg %p298
      $region34: #{tpu_custom_call.1} parent=5 // pred_check_branch
        %301 = sbr.rel (%p299) target = $region36
      $region35: #{tpu_custom_call.1} parent=5 // pred_region
        %s302 = ssub.s32 %s11, 2
        // Predicated region
        $region37: #{tpu_custom_call.1} parent=35 // pred_check
          %p303 = pneg %p108
        $region38: #{tpu_custom_call.1} parent=35 // pred_check_branch
          %305 = sbr.rel (%p303) target = $region40
        $region39: #{tpu_custom_call.1} parent=35 // pred_region
          %s306 = sand.u32 %s93, 1
          %s307 = scalar_lea.sflag [#allocation3], %s306
          %s308 = sand.u32 %s93, 1
          %s309 = smul.addr %s308, 4
          %s310 = scalar_lea.vmem [#allocation2], %s309
          %312 = dma.done %s307, 64
        $region40: #{tpu_custom_call.1} parent=35 // pred_fallthru
          _
      $region36: #{tpu_custom_call.1} parent=5 // pred_fallthru
        _
    $region6: #{tpu_custom_call.1} parent=1 // loop_footer
      %s15 = sadd.s32 1, %s11
    $region7: #{tpu_custom_call.1} parent=1 // loop_footer_branch
      %10 = sbr.rel target = $region3
    $region8: #{tpu_custom_call.1} parent=1 // loop_exit
      _
    %313 = vsyncpa [#allocation3], 1
    %s314 = scalar_lea.sflag [#allocation3], 1
    %315 = vsyncpa %s314, 1

</llo_original>
